<compile_context>
chip_gen: v5e
topology: v5e:2x2
jax: 0.10.0
libtpu: 0.0.40
codegen_flags: <defaults>
</compile_context>

<pallas_src>
import functools
import math

import jax
import jax.numpy as jnp
from jax import lax
from jax.experimental import pallas as pl
from jax.experimental.pallas import tpu as pltpu


def _layernorm_f32(emb_f32, gamma, beta, eps, out_dtype):
    """Fused LayerNorm (eps, biased variance, affine) in f32 -> out_dtype."""
    mean = jnp.mean(emb_f32, axis=-1, keepdims=True)
    centered = emb_f32 - mean
    var = jnp.mean(centered * centered, axis=-1, keepdims=True)
    normed = centered * lax.rsqrt(var + eps)
    return (normed * gamma + beta).astype(out_dtype)


# ---------------------------------------------------------------------------
# Path 1: table resident in VMEM; gather = dynamic VMEM slices.
# ---------------------------------------------------------------------------
def _resident_kernel(ids_ref,    # SMEM (N_pad,) int32  scalar-prefetched ids
                     table_ref,  # VMEM (V, D)   native dtype, resident
                     gamma_ref,  # VMEM (1, D)   f32
                     beta_ref,   # VMEM (1, D)   f32
                     out_ref,    # VMEM (TB, D)  out_dtype
                     gbuf,       # VMEM (TB, D)  native dtype scratch
                     *, eps, tb):
    i = pl.program_id(0)
    base = i * tb

    def gather(t, carry):
        row = ids_ref[base + t]
        gbuf[pl.ds(t, 1), :] = table_ref[pl.ds(row, 1), :]
        return carry

    lax.fori_loop(0, tb, gather, 0, unroll=8)

    out_ref[...] = _layernorm_f32(gbuf[...].astype(jnp.float32),
                                  gamma_ref[...], beta_ref[...],
                                  eps, out_ref.dtype)


# ---------------------------------------------------------------------------
# Path 2: table in HBM; per-row DMA gather, double-buffered across grid steps.
# ---------------------------------------------------------------------------
def _hbm_gather_kernel(ids_ref,    # SMEM (N_pad,) int32
                       table_hbm,  # HBM  (V, D)  native dtype (no auto-DMA)
                       gamma_ref,  # VMEM (1, D)  f32
                       beta_ref,   # VMEM (1, D)  f32
                       out_ref,    # VMEM (TB, D) out_dtype
                       gbuf,       # VMEM (2, TB, D) native dtype
                       sem,        # DMA semaphores (2,)
                       *, eps, tb):
    i = pl.program_id(0)
    nsteps = pl.num_programs(0)

    def issue_block(block_idx, slot):
        base = block_idx * tb

        def issue(t, carry):
            row = ids_ref[base + t]
            pltpu.make_async_copy(
                table_hbm.at[pl.ds(row, 1), :],
                gbuf.at[slot, pl.ds(t, 1), :],
                sem.at[slot],
            ).start()
            return carry

        lax.fori_loop(0, tb, issue, 0, unroll=8)

    # Prime the pipeline with block 0 on the very first step.
    @pl.when(i == 0)
    def _():
        issue_block(0, 0)

    # Prefetch the NEXT block into the other slot before touching this one,
    # so its DMAs overlap this block's LayerNorm + output writeback.
    @pl.when(i + 1 < nsteps)
    def _():
        issue_block(i + 1, (i + 1) % 2)

    slot = i % 2
    # One aggregate wait: all tb row copies into this slot share sem[slot] and
    # DMA semaphores count bytes, so a single wait sized to the whole block
    # (tb rows) consumes every completion.
    pltpu.make_async_copy(
        table_hbm.at[pl.ds(0, tb), :],
        gbuf.at[slot],
        sem.at[slot],
    ).wait()

    out_ref[...] = _layernorm_f32(gbuf[slot].astype(jnp.float32),
                                  gamma_ref[...], beta_ref[...],
                                  eps, out_ref.dtype)


# ---------------------------------------------------------------------------
# Wrapper
# ---------------------------------------------------------------------------
def _round_up(x, m):
    return ((x + m - 1) // m) * m


def embeddings_forward(x_ids, table, gamma, beta, *,
                       token_block=512, eps=1e-5, out_dtype=None,
                       force_hbm_gather=False,
                       resident_table_budget_bytes=16 * 1024 * 1024):
    """Fused nn.Embedding + nn.LayerNorm forward.

    x_ids: integer ids of any shape -> output (*x_ids.shape, D) in out_dtype
    (defaults to table.dtype).  D should be a multiple of 128 for lane-dense
    output stores (correct but slower otherwise).
    """
    lead_shape = x_ids.shape
    V, D = table.shape
    if out_dtype is None:
        out_dtype = table.dtype

    N = math.prod(lead_shape) if lead_shape else 1

    table_bytes = V * D * table.dtype.itemsize
    # Conservative budget (resident table may be double-buffered by the
    # pipeline) -- keeps the fast path safe on v7x's 64 MiB physical VMEM.
    use_resident = (not force_hbm_gather) and (
        table_bytes <= resident_table_budget_bytes)

    tb = max(8, (int(token_block) // 8) * 8)      # multiple of 8 sublanes
    tb = min(tb, _round_up(N, 8))
    if not use_resident:
        # Aggregate-wait descriptor slices tb rows of the table.
        tb = min(tb, max(8, (V // 8) * 8))
    n_pad = _round_up(N, tb)

    # Clamp once here instead of inside the per-token issue loop.
    # TODO(synk): torch.nn.Embedding raises on out-of-range ids; clamped here.
    ids_flat = jnp.clip(x_ids.reshape(-1).astype(jnp.int32), 0, V - 1)
    if n_pad != N:
        ids_flat = jnp.concatenate(
            [ids_flat, jnp.zeros((n_pad - N,), jnp.int32)])

    gamma2d = gamma.reshape(1, D).astype(jnp.float32)
    beta2d = beta.reshape(1, D).astype(jnp.float32)

    grid = (n_pad // tb,)
    out_item = jnp.dtype(out_dtype).itemsize

    if use_resident:
        kernel = functools.partial(_resident_kernel, eps=eps, tb=tb)
        in_specs = [
            pl.BlockSpec((V, D), lambda i, ids: (0, 0)),   # table, resident
            pl.BlockSpec((1, D), lambda i, ids: (0, 0)),   # gamma
            pl.BlockSpec((1, D), lambda i, ids: (0, 0)),   # beta
        ]
        scratch_shapes = [pltpu.VMEM((tb, D), table.dtype)]
        dim_sem = ("parallel",)          # steps are self-contained -> megacore
        vmem_est = (2 * V * D + tb * D) * table.dtype.itemsize \
            + 2 * tb * D * out_item + (2 << 20)
    else:
        kernel = functools.partial(_hbm_gather_kernel, eps=eps, tb=tb)
        in_specs = [
            pl.BlockSpec(memory_space=pl.ANY),             # table stays in HBM
            pl.BlockSpec((1, D), lambda i, ids: (0, 0)),
            pl.BlockSpec((1, D), lambda i, ids: (0, 0)),
        ]
        scratch_shapes = [
            pltpu.VMEM((2, tb, D), table.dtype),           # double-buffered gather
            pltpu.SemaphoreType.DMA((2,)),
        ]
        # Cross-grid-step double buffering carries scratch state between
        # steps, so keep this axis "arbitrary" (no megacore split of the loop).
        dim_sem = ("arbitrary",)
        vmem_est = 2 * tb * D * table.dtype.itemsize \
            + 2 * tb * D * out_item + (2 << 20)

    vmem_limit = int(vmem_est) if vmem_est > (32 << 20) else None

    out_flat = pl.pallas_call(
        kernel,
        out_shape=jax.ShapeDtypeStruct((n_pad, D), out_dtype),
        grid_spec=pltpu.PrefetchScalarGridSpec(
            num_scalar_prefetch=1,                         # ids -> SMEM
            grid=grid,
            in_specs=in_specs,
            out_specs=pl.BlockSpec((tb, D), lambda i, ids: (i, 0)),
            scratch_shapes=scratch_shapes,
        ),
        compiler_params=pltpu.CompilerParams(
            dimension_semantics=dim_sem,
            vmem_limit_bytes=vmem_limit),
    )(ids_flat, table, gamma2d, beta2d)

    return out_flat[:N].reshape(*lead_shape, D)


if __name__ == "__main__":
    # Small shapes consistent with the module: vocab=64, dim_model=128
    # (multiple of 128 so output stores are lane-dense), batch=2, seq=8.
    VOCAB, DIM = 64, 128
    B, S = 2, 8

    key = jax.random.PRNGKey(0)
    k_tab, k_ids, k_g, k_b = jax.random.split(key, 4)

    table = jax.random.normal(k_tab, (VOCAB, DIM), dtype=jnp.float32)
    # Non-trivial affine params to exercise the full LayerNorm path.
    gamma = 1.0 + 0.1 * jax.random.normal(k_g, (DIM,), dtype=jnp.float32)
    beta = 0.1 * jax.random.normal(k_b, (DIM,), dtype=jnp.float32)
    x_ids = jax.random.randint(k_ids, (B, S), 0, VOCAB, dtype=jnp.int32)

    # Pure-JAX reference: embedding gather + LayerNorm (eps=1e-5, biased var).
    ref = table[x_ids]
    mu = ref.mean(-1, keepdims=True)
    va = ((ref - mu) ** 2).mean(-1, keepdims=True)
    ref = (ref - mu) / jnp.sqrt(va + 1e-5) * gamma + beta

    # Path 1: VMEM-resident table fast path (token_block=8 -> 2 grid steps).
    out_res = embeddings_forward(x_ids, table, gamma, beta, token_block=8)
    out_res = jax.block_until_ready(out_res)
    assert out_res.shape == (B, S, DIM)
    assert jnp.allclose(out_res, ref, atol=1e-5, rtol=1e-5)

    # Path 2: HBM per-row-DMA gather with cross-step double buffering and a
    # single aggregate wait per block (the large-vocab path).
    out_hbm = embeddings_forward(x_ids, table, gamma, beta, token_block=8,
                                 force_hbm_gather=True)
    out_hbm = jax.block_until_ready(out_hbm)
    assert out_hbm.shape == (B, S, DIM)
    assert jnp.allclose(out_hbm, ref, atol=1e-5, rtol=1e-5)

    print("KERNEL_OK")
</pallas_src>

<mosaic_0001>
module attributes {stable_mosaic.version = 11 : i64} {
  func.func @_resident_kernel(%arg0: i32, %arg1: memref<16xi32, #tpu.memory_space<smem>>, %arg2: memref<64x128xf32, #tpu.memory_space<vmem>>, %arg3: memref<1x128xf32, #tpu.memory_space<vmem>>, %arg4: memref<1x128xf32, #tpu.memory_space<vmem>>, %arg5: memref<8x128xf32, #tpu.memory_space<vmem>>, %arg6: memref<8x128xf32, #tpu.memory_space<vmem>>) attributes {dimension_semantics = [#tpu.dimension_semantics<parallel>], iteration_bounds = array<i64: 2>, scalar_prefetch = 1 : i64, scratch_operands = 1 : i64, tpu.core_type = #tpu.core_type<tc>, window_params = [{pipeline_mode = #tpu.pipeline_mode<synchronous>, transform_indices = @transform_0, window_bounds = array<i64: 64, 128>}, {pipeline_mode = #tpu.pipeline_mode<synchronous>, transform_indices = @transform_1, window_bounds = array<i64: 1, 128>}, {pipeline_mode = #tpu.pipeline_mode<synchronous>, transform_indices = @transform_2, window_bounds = array<i64: 1, 128>}, {transform_indices = @transform_3, window_bounds = array<i64: 8, 128>}]} {
    %c8_i32 = arith.constant 8 : i32
    %0 = arith.muli %arg0, %c8_i32 : i32
    %c0_i32 = arith.constant 0 : i32
    %1 = arith.addi %0, %c0_i32 : i32
    %2 = arith.index_cast %1 : i32 to index
    %3 = memref.load %arg1[%2] : memref<16xi32, #tpu.memory_space<smem>>
    %4 = arith.index_cast %3 : i32 to index
    %c0 = arith.constant 0 : index
    %5 = vector.load %arg2[%4, %c0] : memref<64x128xf32, #tpu.memory_space<vmem>>, vector<1x128xf32>
    %6 = arith.index_cast %c0_i32 : i32 to index
    %c0_0 = arith.constant 0 : index
    %7 = vector.load %arg6[%6, %c0_0] : memref<8x128xf32, #tpu.memory_space<vmem>>, vector<1x128xf32>
    tpu.vector_store %arg6[%6, %c0_0], %5 {strides = array<i32>} : memref<8x128xf32, #tpu.memory_space<vmem>>, vector<1x128xf32>,
    %c1_i32 = arith.constant 1 : i32
    %8 = arith.addi %0, %c1_i32 : i32
    %9 = arith.index_cast %8 : i32 to index
    %10 = memref.load %arg1[%9] : memref<16xi32, #tpu.memory_space<smem>>
    %11 = arith.index_cast %10 : i32 to index
    %c0_1 = arith.constant 0 : index
    %12 = vector.load %arg2[%11, %c0_1] : memref<64x128xf32, #tpu.memory_space<vmem>>, vector<1x128xf32>
    %13 = arith.index_cast %c1_i32 : i32 to index
    %c0_2 = arith.constant 0 : index
    %14 = vector.load %arg6[%13, %c0_2] : memref<8x128xf32, #tpu.memory_space<vmem>>, vector<1x128xf32>
    tpu.vector_store %arg6[%13, %c0_2], %12 {strides = array<i32>} : memref<8x128xf32, #tpu.memory_space<vmem>>, vector<1x128xf32>,
    %c2_i32 = arith.constant 2 : i32
    %15 = arith.addi %0, %c2_i32 : i32
    %16 = arith.index_cast %15 : i32 to index
    %17 = memref.load %arg1[%16] : memref<16xi32, #tpu.memory_space<smem>>
    %18 = arith.index_cast %17 : i32 to index
    %c0_3 = arith.constant 0 : index
    %19 = vector.load %arg2[%18, %c0_3] : memref<64x128xf32, #tpu.memory_space<vmem>>, vector<1x128xf32>
    %20 = arith.index_cast %c2_i32 : i32 to index
    %c0_4 = arith.constant 0 : index
    %21 = vector.load %arg6[%20, %c0_4] : memref<8x128xf32, #tpu.memory_space<vmem>>, vector<1x128xf32>
    tpu.vector_store %arg6[%20, %c0_4], %19 {strides = array<i32>} : memref<8x128xf32, #tpu.memory_space<vmem>>, vector<1x128xf32>,
    %c3_i32 = arith.constant 3 : i32
    %22 = arith.addi %0, %c3_i32 : i32
    %23 = arith.index_cast %22 : i32 to index
    %24 = memref.load %arg1[%23] : memref<16xi32, #tpu.memory_space<smem>>
    %25 = arith.index_cast %24 : i32 to index
    %c0_5 = arith.constant 0 : index
    %26 = vector.load %arg2[%25, %c0_5] : memref<64x128xf32, #tpu.memory_space<vmem>>, vector<1x128xf32>
    %27 = arith.index_cast %c3_i32 : i32 to index
    %c0_6 = arith.constant 0 : index
    %28 = vector.load %arg6[%27, %c0_6] : memref<8x128xf32, #tpu.memory_space<vmem>>, vector<1x128xf32>
    tpu.vector_store %arg6[%27, %c0_6], %26 {strides = array<i32>} : memref<8x128xf32, #tpu.memory_space<vmem>>, vector<1x128xf32>,
    %c4_i32 = arith.constant 4 : i32
    %29 = arith.addi %0, %c4_i32 : i32
    %30 = arith.index_cast %29 : i32 to index
    %31 = memref.load %arg1[%30] : memref<16xi32, #tpu.memory_space<smem>>
    %32 = arith.index_cast %31 : i32 to index
    %c0_7 = arith.constant 0 : index
    %33 = vector.load %arg2[%32, %c0_7] : memref<64x128xf32, #tpu.memory_space<vmem>>, vector<1x128xf32>
    %34 = arith.index_cast %c4_i32 : i32 to index
    %c0_8 = arith.constant 0 : index
    %35 = vector.load %arg6[%34, %c0_8] : memref<8x128xf32, #tpu.memory_space<vmem>>, vector<1x128xf32>
    tpu.vector_store %arg6[%34, %c0_8], %33 {strides = array<i32>} : memref<8x128xf32, #tpu.memory_space<vmem>>, vector<1x128xf32>,
    %c5_i32 = arith.constant 5 : i32
    %36 = arith.addi %0, %c5_i32 : i32
    %37 = arith.index_cast %36 : i32 to index
    %38 = memref.load %arg1[%37] : memref<16xi32, #tpu.memory_space<smem>>
    %39 = arith.index_cast %38 : i32 to index
    %c0_9 = arith.constant 0 : index
    %40 = vector.load %arg2[%39, %c0_9] : memref<64x128xf32, #tpu.memory_space<vmem>>, vector<1x128xf32>
    %41 = arith.index_cast %c5_i32 : i32 to index
    %c0_10 = arith.constant 0 : index
    %42 = vector.load %arg6[%41, %c0_10] : memref<8x128xf32, #tpu.memory_space<vmem>>, vector<1x128xf32>
    tpu.vector_store %arg6[%41, %c0_10], %40 {strides = array<i32>} : memref<8x128xf32, #tpu.memory_space<vmem>>, vector<1x128xf32>,
    %c6_i32 = arith.constant 6 : i32
    %43 = arith.addi %0, %c6_i32 : i32
    %44 = arith.index_cast %43 : i32 to index
    %45 = memref.load %arg1[%44] : memref<16xi32, #tpu.memory_space<smem>>
    %46 = arith.index_cast %45 : i32 to index
    %c0_11 = arith.constant 0 : index
    %47 = vector.load %arg2[%46, %c0_11] : memref<64x128xf32, #tpu.memory_space<vmem>>, vector<1x128xf32>
    %48 = arith.index_cast %c6_i32 : i32 to index
    %c0_12 = arith.constant 0 : index
    %49 = vector.load %arg6[%48, %c0_12] : memref<8x128xf32, #tpu.memory_space<vmem>>, vector<1x128xf32>
    tpu.vector_store %arg6[%48, %c0_12], %47 {strides = array<i32>} : memref<8x128xf32, #tpu.memory_space<vmem>>, vector<1x128xf32>,
    %c7_i32 = arith.constant 7 : i32
    %50 = arith.addi %0, %c7_i32 : i32
    %51 = arith.index_cast %50 : i32 to index
    %52 = memref.load %arg1[%51] : memref<16xi32, #tpu.memory_space<smem>>
    %53 = arith.index_cast %52 : i32 to index
    %c0_13 = arith.constant 0 : index
    %54 = vector.load %arg2[%53, %c0_13] : memref<64x128xf32, #tpu.memory_space<vmem>>, vector<1x128xf32>
    %55 = arith.index_cast %c7_i32 : i32 to index
    %c0_14 = arith.constant 0 : index
    %56 = vector.load %arg6[%55, %c0_14] : memref<8x128xf32, #tpu.memory_space<vmem>>, vector<1x128xf32>
    tpu.vector_store %arg6[%55, %c0_14], %54 {strides = array<i32>} : memref<8x128xf32, #tpu.memory_space<vmem>>, vector<1x128xf32>,
    %c8_i32_15 = arith.constant 8 : i32
    %c0_16 = arith.constant 0 : index
    %c0_17 = arith.constant 0 : index
    %57 = vector.load %arg6[%c0_16, %c0_17] : memref<8x128xf32, #tpu.memory_space<vmem>>, vector<8x128xf32>
    %c0_18 = arith.constant 0 : index
    %c0_19 = arith.constant 0 : index
    %58 = vector.load %arg3[%c0_18, %c0_19] : memref<1x128xf32, #tpu.memory_space<vmem>>, vector<1x128xf32>
    %c0_20 = arith.constant 0 : index
    %c0_21 = arith.constant 0 : index
    %59 = vector.load %arg4[%c0_20, %c0_21] : memref<1x128xf32, #tpu.memory_space<vmem>>, vector<1x128xf32>
    %cst = arith.constant dense<0.000000e+00> : vector<8xf32>
    %60 = vector.multi_reduction <add>, %57, %cst [1] : vector<8x128xf32> to vector<8xf32>
    %61 = vector.shape_cast %60 : vector<8xf32> to vector<8x1xf32>
    %cst_22 = arith.constant 1.280000e+02 : f32
    %62 = vector.broadcast %cst_22 : f32 to vector<8x1xf32>
    %63 = arith.divf %61, %62 : vector<8x1xf32>
    %64 = vector.broadcast %63 : vector<8x1xf32> to vector<8x128xf32>
    %65 = arith.subf %57, %64 : vector<8x128xf32>
    %66 = arith.mulf %65, %65 : vector<8x128xf32>
    %cst_23 = arith.constant dense<0.000000e+00> : vector<8xf32>
    %67 = vector.multi_reduction <add>, %66, %cst_23 [1] : vector<8x128xf32> to vector<8xf32>
    %68 = vector.shape_cast %67 : vector<8xf32> to vector<8x1xf32>
    %cst_24 = arith.constant 1.280000e+02 : f32
    %69 = vector.broadcast %cst_24 : f32 to vector<8x1xf32>
    %70 = arith.divf %68, %69 : vector<8x1xf32>
    %cst_25 = arith.constant 9.99999974E-6 : f32
    %71 = vector.broadcast %cst_25 : f32 to vector<8x1xf32>
    %72 = arith.addf %70, %71 : vector<8x1xf32>
    %73 = math.rsqrt %72 : vector<8x1xf32>
    %74 = vector.broadcast %73 : vector<8x1xf32> to vector<8x128xf32>
    %75 = arith.mulf %65, %74 : vector<8x128xf32>
    %76 = vector.broadcast %58 : vector<1x128xf32> to vector<8x128xf32>
    %77 = arith.mulf %75, %76 : vector<8x128xf32>
    %78 = vector.broadcast %59 : vector<1x128xf32> to vector<8x128xf32>
    %79 = arith.addf %77, %78 : vector<8x128xf32>
    %c0_26 = arith.constant 0 : index
    %c0_27 = arith.constant 0 : index
    %80 = vector.load %arg5[%c0_26, %c0_27] : memref<8x128xf32, #tpu.memory_space<vmem>>, vector<8x128xf32>
    tpu.vector_store %arg5[%c0_26, %c0_27], %79 {strides = array<i32>} : memref<8x128xf32, #tpu.memory_space<vmem>>, vector<8x128xf32>,
    return
  }
  func.func @transform_0(%arg0: i32, %arg1: memref<16xi32, #tpu.memory_space<smem>>) -> (i32, i32) {
    %c0_i32 = arith.constant 0 : i32
    %c0_i32_0 = arith.constant 0 : i32
    %c0_i32_1 = arith.constant 0 : i32
    return %c0_i32, %c0_i32_0 : i32, i32
  }
  func.func @transform_1(%arg0: i32, %arg1: memref<16xi32, #tpu.memory_space<smem>>) -> (i32, i32) {
    %c0_i32 = arith.constant 0 : i32
    %c0_i32_0 = arith.constant 0 : i32
    %c0_i32_1 = arith.constant 0 : i32
    return %c0_i32, %c0_i32_0 : i32, i32
  }
  func.func @transform_2(%arg0: i32, %arg1: memref<16xi32, #tpu.memory_space<smem>>) -> (i32, i32) {
    %c0_i32 = arith.constant 0 : i32
    %c0_i32_0 = arith.constant 0 : i32
    %c0_i32_1 = arith.constant 0 : i32
    return %c0_i32, %c0_i32_0 : i32, i32
  }
  func.func @transform_3(%arg0: i32, %arg1: memref<16xi32, #tpu.memory_space<smem>>) -> (i32, i32) {
    %c0_i32 = arith.constant 0 : i32
    %c0_i32_0 = arith.constant 0 : i32
    return %arg0, %c0_i32 : i32, i32
  }
}

</mosaic_0001>

<llo_original>
// kernel: tpu_custom_call.1
$region0: #{tpu_custom_call.1}
  #allocation0 [shape = 'u32[]', space=smem, size = 0x4, offset = 0x4, fixed_abs, tag = 'smem constant byte address 0x4 - core index']
  #allocation1 [shape = 'u32[72,128]{1,0:T(1,128)}', space=vmem, size = 0x9000, scoped, tag = 'internal scratch']
  #allocation2 [shape = 'f32[8,128]{1,0:T(8,128)}', space=vmem, size = 0x1000, scoped, tag = 'scratch operand']
  #allocation3 [shape = 's32[1]{0}', space=sflag, size = 0x4, scoped, tag = 'scoped memory for tpu_custom_call.1']
  #allocation4 [shape = 'u8[512]{0}', space=smem, size = 0x200, scoped, tag = 'prefetched SMEM operand 0']
  %s0 = inlined_call_operand.hbm [shape: s32[16], index: 0, kind: input, shape index: {}]
  %s1 = inlined_call_operand.hbm [shape: f32[64,128], index: 1, kind: input, shape index: {}]
  %s2 = inlined_call_operand.vmem [shape: f32[1,128], index: 2, kind: input, shape index: {}]
  %s3 = inlined_call_operand.vmem [shape: f32[1,128], index: 3, kind: input, shape index: {}]
  %s4 = inlined_call_operand.hbm [shape: f32[16,128], index: 4, kind: output, shape index: {}]
  %s5 = sld [smem:[#allocation0]]
  $region49: #{tpu_custom_call.1} parent=0
    _
  %s7 = ssub.s32 1, %s5
  %s8 = scalar_select 0, %s7, %s5
  %s10 = sshll.u32 %s0, 4
  %s11 = int_to_ptr.hbm [resolvable:$true] %s10
  %13 = dma.hbm_to_smem %s11, 16, [#allocation4], [#allocation3]
  %15 = dma.done [#allocation3], 16
  %16 = sfence
  $region1: #{tpu_custom_call.1} parent=0
    #allocation5 [shape = 'u8[32768]{0}', space=vmem, size = 0x8000, scoped, tag = 'input window, operand 1, single buffered']
    #allocation6 [shape = 's32[2]{0}', space=sflag, size = 0x8, scoped, tag = 'scoped memory for tpu_custom_call.1']
    #allocation7 [shape = 's32[2]{0}', space=sflag, size = 0x8, scoped, tag = 'scoped memory for tpu_custom_call.1']
    #allocation8 [shape = 'u8[8192]{0}', space=vmem, size = 0x2000, scoped, tag = 'output window, operand 0']
    %17 = vsyncpa [#allocation6], 0
    %18 = vsyncpa [#allocation7], 0
    %s19 = scalar_lea.sflag [#allocation7], 1
    %20 = vsyncpa %s19, 0
    loop: start=0, step=1, limit=4
    $region2: #{tpu_custom_call.1} parent=1 // loop_pre_header
      _
    $region3: #{tpu_custom_call.1} parent=1 // loop_header
      %s22 = sphi 0, %s26
      %p23 = scmp.ge.s32.totalorder %s22, 4
      %s30 = sphi 0, %s30
      %s32 = sphi 0, %s30
      %s33 = sphi 0, %s32
      %s47 = sphi 0, %s33
      %s51 = sphi 0, %s51
      %s53 = sphi 0, %s51
      %s54 = sphi 0, %s53
      %s68 = sphi 0, %s54
      %s72 = sphi 0, %s72
      %s74 = sphi 0, %s72
      %s75 = sphi 0, %s74
      %s89 = sphi 0, %s75
      %s95 = sphi 0, %s97
      %s98 = sphi 0, %s95
      %s99 = sphi 0, %s98
      %s115 = sphi 0, %s99
    $region4: #{tpu_custom_call.1} parent=1 // loop_header_branch
      %25 = sbr.rel (%p23) target = $region8
    $region5: #{tpu_custom_call.1} parent=1 // loop_body
      %s27 = ssub.s32 %s22, 1
      %s28 = ssub.s32 %s22, 2
      %s29 = sadd.s32 %s22, 1
      %s31 = sadd.s32 %s30, 1
      %p34 = scmp.eq.s32.totalorder %s22, 1
      %p35 = scmp.ne.s32.totalorder %s30, %s32
      %p36 = scmp.eq.s32.totalorder %s22, 0
      %p37 = por %p35, %p36
      %p38 = scmp.ne.s32.totalorder %s30, %s32
      %p39 = scmp.eq.s32.totalorder %s27, 1
      %p40 = por %p38, %p39
      %p41 = scmp.ne.s32.totalorder %s32, %s33
      %p42 = scmp.eq.s32.totalorder %s27, 0
      %p43 = por %p41, %p42
      %p44 = scmp.ne.s32.totalorder %s32, %s33
      %p45 = scmp.eq.s32.totalorder %s28, 1
      %p46 = por %p44, %p45
      %p48 = scmp.ne.s32.totalorder %s33, %s47
      %p49 = scmp.eq.s32.totalorder %s28, 0
      %p50 = por %p48, %p49
      %s52 = sadd.s32 %s51, 1
      %p55 = scmp.eq.s32.totalorder %s22, 1
      %p56 = scmp.ne.s32.totalorder %s51, %s53
      %p57 = scmp.eq.s32.totalorder %s22, 0
      %p58 = por %p56, %p57
      %p59 = scmp.ne.s32.totalorder %s51, %s53
      %p60 = scmp.eq.s32.totalorder %s27, 1
      %p61 = por %p59, %p60
      %p62 = scmp.ne.s32.totalorder %s53, %s54
      %p63 = scmp.eq.s32.totalorder %s27, 0
      %p64 = por %p62, %p63
      %p65 = scmp.ne.s32.totalorder %s53, %s54
      %p66 = scmp.eq.s32.totalorder %s28, 1
      %p67 = por %p65, %p66
      %p69 = scmp.ne.s32.totalorder %s54, %s68
      %p70 = scmp.eq.s32.totalorder %s28, 0
      %p71 = por %p69, %p70
      %s73 = sadd.s32 %s72, 1
      %p76 = scmp.eq.s32.totalorder %s22, 1
      %p77 = scmp.ne.s32.totalorder %s72, %s74
      %p78 = scmp.eq.s32.totalorder %s22, 0
      %p79 = por %p77, %p78
      %p80 = scmp.ne.s32.totalorder %s72, %s74
      %p81 = scmp.eq.s32.totalorder %s27, 1
      %p82 = por %p80, %p81
      %p83 = scmp.ne.s32.totalorder %s74, %s75
      %p84 = scmp.eq.s32.totalorder %s27, 0
      %p85 = por %p83, %p84
      %p86 = scmp.ne.s32.totalorder %s74, %s75
      %p87 = scmp.eq.s32.totalorder %s28, 1
      %p88 = por %p86, %p87
      %p90 = scmp.ne.s32.totalorder %s75, %s89
      %p91 = scmp.eq.s32.totalorder %s28, 0
      %p92 = por %p90, %p91
      %s93 = ssub.s32 %s22, %s29
      %p94 = scmp.eq.s32.totalorder %s93, 0
      %s96 = sadd.s32 %s95, 1
      %s97 = scalar_select %p94, %s95, %s96
      %p100 = pneg %p94
      %p101 = scmp.eq.s32.totalorder %s22, 1
      %p102 = por %p100, %p101
      %p103 = scmp.ne.s32.totalorder %s95, %s98
      %p104 = scmp.eq.s32.totalorder %s22, 0
      %p105 = por %p103, %p104
      %p106 = scmp.ne.s32.totalorder %s95, %s98
      %p107 = scmp.eq.s32.totalorder %s27, 1
      %p108 = por %p106, %p107
      %p109 = scmp.ne.s32.totalorder %s98, %s99
      %p110 = scmp.eq.s32.totalorder %s27, 0
      %p111 = por %p109, %p110
      %p112 = scmp.ne.s32.totalorder %s98, %s99
      %p113 = scmp.eq.s32.totalorder %s28, 1
      %p114 = por %p112, %p113
      %p116 = scmp.ne.s32.totalorder %s99, %s115
      %p117 = scmp.eq.s32.totalorder %s28, 0
      %p118 = por %p116, %p117
      %p119 = scmp.le.s32.totalorder 1, %s22
      %p120 = scmp.lt.s32.totalorder %s22, 3
      %p121 = pnand %p119, %p120
      %p122 = pneg %p121
      // Predicated region
      $region9: #{tpu_custom_call.1} parent=5 // pred_check
        _
      $region10: #{tpu_custom_call.1} parent=5 // pred_check_branch
        %124 = sbr.rel (%p121) target = $region12
      $region11: #{tpu_custom_call.1} parent=5 // pred_region
        %s125 = ssub.s32 %s22, 1
        // Predicated region
        $region13: #{tpu_custom_call.1} parent=11 // pred_check
          %p126 = pneg %p43
        $region14: #{tpu_custom_call.1} parent=11 // pred_check_branch
          %128 = sbr.rel (%p126) target = $region16
        $region15: #{tpu_custom_call.1} parent=11 // pred_region
          %130 = vsyncadd [#allocation6], 0
          %s131 = sshll.u32 %s1, 4
          %s132 = int_to_ptr.hbm [resolvable:$true] %s131
          %s133 = sshll.u32 [#allocation5], 4
          %s134 = int_to_ptr.vmem [resolvable:$true] %s133
          %139 = dma.hbm_to_vmem [thread:$0]  %s132, 1024, %s134, [#allocation6], 128, 128, 8
        $region16: #{tpu_custom_call.1} parent=11 // pred_fallthru
          _
        // Predicated region
        $region17: #{tpu_custom_call.1} parent=11 // pred_check
          %p140 = pneg %p64
        $region18: #{tpu_custom_call.1} parent=11 // pred_check_branch
          %142 = sbr.rel (%p140) target = $region20
        $region19: #{tpu_custom_call.1} parent=11 // pred_region
          _
        $region20: #{tpu_custom_call.1} parent=11 // pred_fallthru
          _
        // Predicated region
        $region21: #{tpu_custom_call.1} parent=11 // pred_check
          %p143 = pneg %p85
        $region22: #{tpu_custom_call.1} parent=11 // pred_check_branch
          %145 = sbr.rel (%p143) target = $region24
        $region23: #{tpu_custom_call.1} parent=11 // pred_region
          _
        $region24: #{tpu_custom_call.1} parent=11 // pred_fallthru
          _
      $region12: #{tpu_custom_call.1} parent=5 // pred_fallthru
        _
      %p146 = scmp.lt.s32.totalorder %s22, 2
      // Predicated region
      $region25: #{tpu_custom_call.1} parent=5 // pred_check
        %p147 = pneg %p146
      $region26: #{tpu_custom_call.1} parent=5 // pred_check_branch
        %149 = sbr.rel (%p147) target = $region28
      $region27: #{tpu_custom_call.1} parent=5 // pred_region
        _
      $region28: #{tpu_custom_call.1} parent=5 // pred_fallthru
        _
      %p150 = scmp.le.s32.totalorder 1, %s22
      %p151 = scmp.lt.s32.totalorder %s22, 3
      %p152 = pnand %p150, %p151
      %p153 = pneg %p152
      // Predicated region
      $region29: #{tpu_custom_call.1} parent=5 // pred_check
        _
      $region30: #{tpu_custom_call.1} parent=5 // pred_check_branch
        %155 = sbr.rel (%p152) target = $region32
      $region31: #{tpu_custom_call.1} parent=5 // pred_region
        %s156 = ssub.s32 %s22, 1
        // Predicated region
        $region33: #{tpu_custom_call.1} parent=31 // pred_check
          %p157 = pneg %p43
        $region34: #{tpu_custom_call.1} parent=31 // pred_check_branch
          %159 = sbr.rel (%p157) target = $region36
        $region35: #{tpu_custom_call.1} parent=31 // pred_region
          %161 = dma.done [#allocation6], 1024
        $region36: #{tpu_custom_call.1} parent=31 // pred_fallthru
          _
        %p162 = pneg %p43
        %p163 = pneg %p40
        %p164 = pneg %p64
        %p165 = pneg %p61
        %p166 = pneg %p85
        %p167 = pneg %p82
        %p168 = pneg %p111
        %p169 = pneg %p108
        %s170 = sand.u32 %s98, 1
        %s171 = scalar_lea.sflag [#allocation7], %s170
        %s172 = sand.u32 %s98, 1
        %s173 = smul.addr %s172, 8
        %s174 = scalar_lea.vmem [#allocation8], %s173
        %s175 = smul.u32 %s27, 8
        %s176 = sld [smem:[#allocation4 + %s175]]
        %s177 = scalar_lea.vmem [#allocation5], %s176
        %v178 = vld [vmem:[%s177] sm:$0x1]
        %179 = vst [vmem:[#allocation2] sm:$0x1] %v178
        %s180 = sadd.s32 %s175, 1
        %s181 = sld [smem:[#allocation4 + %s180]]
        %s182 = scalar_lea.vmem [#allocation5], %s181
        %v183 = vld [vmem:[%s182] sm:$0x1]
        %184 = vst [vmem:[#allocation2 + $0x1] sm:$0x1] %v183
        %s185 = sadd.s32 %s175, 2
        %s186 = sld [smem:[#allocation4 + %s185]]
        %s187 = scalar_lea.vmem [#allocation5], %s186
        %v188 = vld [vmem:[%s187] sm:$0x1]
        %189 = vst [vmem:[#allocation2 + $0x2] sm:$0x1] %v188
        %s190 = sadd.s32 %s175, 3
        %s191 = sld [smem:[#allocation4 + %s190]]
        %s192 = scalar_lea.vmem [#allocation5], %s191
        %v193 = vld [vmem:[%s192] sm:$0x1]
        %194 = vst [vmem:[#allocation2 + $0x3] sm:$0x1] %v193
        %s195 = sadd.s32 %s175, 4
        %s196 = sld [smem:[#allocation4 + %s195]]
        %s197 = scalar_lea.vmem [#allocation5], %s196
        %v198 = vld [vmem:[%s197] sm:$0x1]
        %199 = vst [vmem:[#allocation2 + $0x4] sm:$0x1] %v198
        %s200 = sadd.s32 %s175, 5
        %s201 = sld [smem:[#allocation4 + %s200]]
        %s202 = scalar_lea.vmem [#allocation5], %s201
        %v203 = vld [vmem:[%s202] sm:$0x1]
        %204 = vst [vmem:[#allocation2 + $0x5] sm:$0x1] %v203
        %s205 = sadd.s32 %s175, 6
        %s206 = sld [smem:[#allocation4 + %s205]]
        %s207 = scalar_lea.vmem [#allocation5], %s206
        %v208 = vld [vmem:[%s207] sm:$0x1]
        %209 = vst [vmem:[#allocation2 + $0x6] sm:$0x1] %v208
        %s210 = sadd.s32 %s175, 7
        %s211 = sld [smem:[#allocation4 + %s210]]
        %s212 = scalar_lea.vmem [#allocation5], %s211
        %v213 = vld [vmem:[%s212] sm:$0x1]
        %214 = vst [vmem:[#allocation2 + $0x7] sm:$0x1] %v213
        %v215 = vld [vmem:[#allocation2] sm:$0xff]
        %v216 = vld [vmem:[%s2] sm:$0x1]
        %v217 = vld [vmem:[%s3] sm:$0x1]
        %218 = vadd.xlane.f32.xlu0 %v215
        %v219 = vpop.xlane.xlu0 %218
        %v220 = vrcp.pop 128.0
        %v221 = vmul.f32 128.0, %v220
        %v222 = vsub.f32 1.0, %v221
        %v223 = vmul.f32 %v220, %v222
        %v224 = vadd.f32 %v220, %v223
        %vm225 = vweird.f32 %v220
        %v226 = vsel %vm225, %v220, %v224
        %v227 = vmul.f32 %v219, %v226
        %v228 = vsub.f32 %v215, %v227
        %v229 = vmul.f32 %v228, %v228
        %230 = vadd.xlane.f32.xlu0 %v229
        %v231 = vpop.xlane.xlu0 %230
        %v232 = vmul.f32 %v231, %v226
        %v233 = vadd.f32 %v232, 1e-05
        %v234 = vrsqrt.pop %v233
        %v235 = vmul.f32 %v234, %v233
        %v236 = vmul.f32 %v235, %v234
        %v237 = vmul.f32 0.5, %v236
        %v238 = vsub.f32 1.5, %v237
        %v239 = vmul.f32 %v234, %v238
        %vm240 = vweird.f32 %v233
        %vm241 = vweird.f32 %v234
        %vm242 = vmor %vm240, %vm241
        %v243 = vsel %vm242, %v234, %v239
        %v244 = vmul.f32 %v228, %v243
        %v246 = vperm.slane %v216, 0
        %v248 = vmul.f32 %v244, %v246
        %v250 = vperm.slane %v217, 0
        %v252 = vadd.f32 %v248, %v250
        %253 = vst [vmem:[%s174] sm:$0xff] %v252
        %s254 = sand.u32 %s98, 1
        %s255 = scalar_lea.sflag [#allocation7], %s254
        %s256 = sand.u32 %s98, 1
        %s257 = smul.addr %s256, 8
        %s258 = scalar_lea.vmem [#allocation8], %s257
        // Predicated region
        $region37: #{tpu_custom_call.1} parent=31 // pred_check
          %p259 = pneg %p108
        $region38: #{tpu_custom_call.1} parent=31 // pred_check_branch
          %261 = sbr.rel (%p259) target = $region40
        $region39: #{tpu_custom_call.1} parent=31 // pred_region
          %263 = vsyncadd %s255, 0
          %s264 = smul.addr %s27, 8
          %s265 = scalar_lea.hbm %s4, %s264
          %s267 = sshll.u32 %s258, 4
          %s268 = int_to_ptr.vmem [resolvable:$true] %s267
          %s269 = sshll.u32 %s265, 4
          %s270 = int_to_ptr.hbm [resolvable:$true] %s269
          %272 = dma.vmem_to_hbm [thread:$0]  %s268, 128, %s270, %s255
        $region40: #{tpu_custom_call.1} parent=31 // pred_fallthru
          _
      $region32: #{tpu_custom_call.1} parent=5 // pred_fallthru
        _
      %p273 = scmp.le.s32.totalorder 2, %s22
      // Predicated region
      $region41: #{tpu_custom_call.1} parent=5 // pred_check
        %p274 = pneg %p273
      $region42: #{tpu_custom_call.1} parent=5 // pred_check_branch
        %276 = sbr.rel (%p274) target = $region44
      $region43: #{tpu_custom_call.1} parent=5 // pred_region
        %s277 = ssub.s32 %s22, 2
        // Predicated region
        $region45: #{tpu_custom_call.1} parent=43 // pred_check
          %p278 = pneg %p114
        $region46: #{tpu_custom_call.1} parent=43 // pred_check_branch
          %280 = sbr.rel (%p278) target = $region48
        $region47: #{tpu_custom_call.1} parent=43 // pred_region
          %s281 = sand.u32 %s99, 1
          %s282 = scalar_lea.sflag [#allocation7], %s281
          %s283 = sand.u32 %s99, 1
          %s284 = smul.addr %s283, 8
          %s285 = scalar_lea.vmem [#allocation8], %s284
          %287 = dma.done %s282, 128
        $region48: #{tpu_custom_call.1} parent=43 // pred_fallthru
          _
      $region44: #{tpu_custom_call.1} parent=5 // pred_fallthru
        _
    $region6: #{tpu_custom_call.1} parent=1 // loop_footer
      %s26 = sadd.s32 1, %s22
    $region7: #{tpu_custom_call.1} parent=1 // loop_footer_branch
      %21 = sbr.rel target = $region3
    $region8: #{tpu_custom_call.1} parent=1 // loop_exit
      _
    %288 = vsyncpa [#allocation6], 1
    %s289 = scalar_lea.sflag [#allocation6], 1
    %290 = vsyncpa %s289, 1
    %291 = vsyncpa [#allocation7], 1
    %s292 = scalar_lea.sflag [#allocation7], 1
    %293 = vsyncpa %s292, 1

</llo_original>
